<compile_context>
chip_gen: v7x
topology: tpu7x:2x2x1
jax: 0.10.0
libtpu: 0.0.40
codegen_flags: <defaults>
</compile_context>

<pallas_src>
import functools
import math

import jax
import jax.numpy as jnp
import numpy as np
from jax.experimental import pallas as pl
from jax.experimental.pallas import tpu as pltpu

FREQ_DIM = 256
_VMEM_LIMIT = 48 * 1024 * 1024  # headroom, still < v7x 64 MiB physical VMEM


def _vmem_spec():
    return pl.BlockSpec(memory_space=pltpu.MemorySpace.VMEM)


def _largest_divisor_leq(n, cap):
    t = min(n, cap)
    while n % t:
        t -= 1
    return t


# ---------------------------------------------------------------------------
# 3x3 conv (padding=1, stride 1 or 2): per-tap accumulated matmuls, no im2col
# ---------------------------------------------------------------------------

def _conv_tap_kernel(x_ref, w_ref, b_ref, o_ref, *, taps, cin, tr, wo, activation):
    # x_ref: (1, Hin, Win, G*cin)  padded / space-to-depth image, resident across
    #        the row-tile grid axis.   w_ref: (9, cin, cout) bf16.  b_ref: (1, cout) f32.
    # o_ref: (1, tr, wo, cout)
    r = pl.program_id(1)
    row0 = r * tr
    cout = o_ref.shape[-1]
    acc = jnp.zeros((tr * wo, cout), jnp.float32)
    for t, (roff, coff, g) in enumerate(taps):
        xt = x_ref[0, pl.ds(row0 + roff, tr), pl.ds(coff, wo), pl.ds(g * cin, cin)]
        acc = acc + jnp.dot(xt.reshape(tr * wo, cin), w_ref[t],
                            preferred_element_type=jnp.float32)
    acc = acc + b_ref[...]
    if activation == "silu":
        acc = acc * jax.nn.sigmoid(acc)
    o_ref[0] = acc.reshape(tr, wo, cout).astype(o_ref.dtype)


def conv3x3(x_nhwc, w_oihw, b, stride, activation, *, row_tile_cap=64):
    B, H, W, Cin = x_nhwc.shape
    Cout = w_oihw.shape[0]
    Ho = (H + 2 - 3) // stride + 1
    Wo = (W + 2 - 3) // stride + 1

    # PyTorch [Cout, Cin, kh, kw] -> per-tap [9, Cin, Cout], tap order (dy, dx)
    w_taps = jnp.transpose(w_oihw, (2, 3, 1, 0)).reshape(9, Cin, Cout).astype(jnp.bfloat16)
    b2 = b.reshape(1, Cout).astype(jnp.float32)

    # TODO(synk): padding / space-to-depth layout prep is plain XLA glue (O(1x) data).
    xp = jnp.pad(x_nhwc, ((0, 0), (1, 1), (1, 1), (0, 0)))
    if stride == 1:
        xin = xp.astype(jnp.bfloat16)
        taps = [(dy, dx, 0) for dy in range(3) for dx in range(3)]
        groups = 1
    else:  # stride == 2: space-to-depth -> stride-1 conv with 4 channel groups
        Hp, Wp = H + 2, W + 2
        Hpe, Wpe = Hp + (Hp % 2), Wp + (Wp % 2)
        xpe = jnp.pad(xp, ((0, 0), (0, Hpe - Hp), (0, Wpe - Wp), (0, 0)))
        xs = xpe.reshape(B, Hpe // 2, 2, Wpe // 2, 2, Cin)
        xs = jnp.transpose(xs, (0, 1, 3, 2, 4, 5)).reshape(B, Hpe // 2, Wpe // 2, 4 * Cin)
        xin = xs.astype(jnp.bfloat16)
        taps = [(dy // 2, dx // 2, 2 * (dy % 2) + (dx % 2))
                for dy in range(3) for dx in range(3)]
        groups = 4
    _, Hin, Win, _ = xin.shape

    tr = _largest_divisor_leq(Ho, row_tile_cap)
    grid = (B, Ho // tr)
    kern = functools.partial(_conv_tap_kernel, taps=taps, cin=Cin, tr=tr, wo=Wo,
                             activation=activation)
    return pl.pallas_call(
        kern,
        out_shape=jax.ShapeDtypeStruct((B, Ho, Wo, Cout), jnp.bfloat16),
        grid_spec=pltpu.PrefetchScalarGridSpec(
            num_scalar_prefetch=0,
            grid=grid,
            in_specs=[
                pl.BlockSpec((1, Hin, Win, groups * Cin), lambda bi, ri: (bi, 0, 0, 0)),
                pl.BlockSpec((9, Cin, Cout), lambda bi, ri: (0, 0, 0)),
                pl.BlockSpec((1, Cout), lambda bi, ri: (0, 0)),
            ],
            out_specs=pl.BlockSpec((1, tr, Wo, Cout), lambda bi, ri: (bi, ri, 0, 0)),
        ),
        compiler_params=pltpu.CompilerParams(
            dimension_semantics=("parallel", "parallel"),
            vmem_limit_bytes=_VMEM_LIMIT,
        ),
    )(xin, w_taps, b2)


# ---------------------------------------------------------------------------
# Fused TimestepEmbedder MLP + hoisted SiLU(temb)
# ---------------------------------------------------------------------------

def _temb_kernel(freq_ref, w1_ref, b1_ref, w2_ref, b2_ref, o_ref):
    x = jnp.dot(freq_ref[...], w1_ref[...], preferred_element_type=jnp.float32) + b1_ref[...]
    x = x * jax.nn.sigmoid(x)
    x = jnp.dot(x.astype(jnp.bfloat16), w2_ref[...],
                preferred_element_type=jnp.float32) + b2_ref[...]
    x = x * jax.nn.sigmoid(x)   # SiLU(temb), hoisted out of every zero block
    o_ref[...] = x.astype(o_ref.dtype)


def t_embed_silu(freq, w1, b1, w2, b2):
    B = freq.shape[0]
    C = w1.shape[1]
    return pl.pallas_call(
        _temb_kernel,
        out_shape=jax.ShapeDtypeStruct((B, C), jnp.bfloat16),
        in_specs=[_vmem_spec()] * 5,
        out_specs=_vmem_spec(),
    )(freq.astype(jnp.bfloat16), w1.astype(jnp.bfloat16), b1.reshape(1, C).astype(jnp.float32),
      w2.astype(jnp.bfloat16), b2.reshape(1, C).astype(jnp.float32))


def timestep_embedding(t, dim=FREQ_DIM, max_period=10000.0):
    # TODO(synk): sinusoidal table stays as XLA glue (transcendentals on [B,256]).
    half = dim // 2
    freqs = jnp.exp(-math.log(max_period) * jnp.arange(half, dtype=jnp.float32) / half)
    args = t.astype(jnp.float32)[:, None] * freqs[None, :]
    return jnp.concatenate([jnp.cos(args), jnp.sin(args)], axis=-1)


# ---------------------------------------------------------------------------
# All ZeroControlBlocks in one pallas_call: grid (depth, token_tiles)
# ---------------------------------------------------------------------------

def _zero_blocks_kernel(s_ref, wa_ref, ba_ref, wl_ref, bl_ref, h_ref, o_ref, ada_ref):
    j = pl.program_id(1)
    B = h_ref.shape[0]
    C = wl_ref.shape[-1]

    @pl.when(j == 0)  # adaLN vector computed once per depth step, kept in scratch
    def _():
        ada_ref[...] = (jnp.dot(s_ref[...], wa_ref[0], preferred_element_type=jnp.float32)
                        + ba_ref[0])

    ada = ada_ref[...]
    for bb in range(B):
        shift = ada[bb, :C][None, :]
        scale = ada[bb, C:][None, :]
        h_b = h_ref[bb].astype(jnp.float32)                 # (tn, C)
        h_mod = h_b * (1.0 + scale) + shift                 # modulate()
        out_b = jnp.dot(h_mod.astype(jnp.bfloat16), wl_ref[0],
                        preferred_element_type=jnp.float32) + bl_ref[0]
        o_ref[0, bb] = out_b.astype(o_ref.dtype)


def zero_blocks(h, s, za_w, za_b, zl_w, zl_b, *, token_tile_cap=256):
    B, N, C = h.shape
    D = za_w.shape[0]
    tn = _largest_divisor_leq(N, token_tile_cap)
    if tn != N and tn % 8 != 0:
        tn = N  # keep the (8,128) block rule satisfied for awkward N
    grid = (D, N // tn)
    return pl.pallas_call(
        _zero_blocks_kernel,
        out_shape=jax.ShapeDtypeStruct((D, B, N, C), jnp.float32),
        grid_spec=pltpu.PrefetchScalarGridSpec(
            num_scalar_prefetch=0,
            grid=grid,
            in_specs=[
                pl.BlockSpec((B, C), lambda d, j: (0, 0)),               # SiLU(temb)
                pl.BlockSpec((1, C, 2 * C), lambda d, j: (d, 0, 0)),     # ada weight
                pl.BlockSpec((1, 1, 2 * C), lambda d, j: (d, 0, 0)),     # ada bias
                pl.BlockSpec((1, C, C), lambda d, j: (d, 0, 0)),         # zero_linear w
                pl.BlockSpec((1, 1, C), lambda d, j: (d, 0, 0)),         # zero_linear b
                pl.BlockSpec((B, tn, C), lambda d, j: (0, j, 0)),        # h tokens
            ],
            out_specs=pl.BlockSpec((1, B, tn, C), lambda d, j: (d, 0, j, 0)),
            scratch_shapes=[pltpu.VMEM((B, 2 * C), jnp.float32)],
        ),
        compiler_params=pltpu.CompilerParams(
            dimension_semantics=("parallel", "arbitrary"),
            vmem_limit_bytes=_VMEM_LIMIT,
        ),
    )(s.astype(jnp.bfloat16),
      za_w.astype(jnp.bfloat16), za_b.astype(jnp.float32),
      zl_w.astype(jnp.bfloat16), zl_b.astype(jnp.float32),
      h.astype(jnp.bfloat16))


# ---------------------------------------------------------------------------
# Parameter init (deterministic, matches shapes declared in __init__)
# ---------------------------------------------------------------------------

def conv_specs(in_channels, hidden_size):
    return [
        (in_channels, 16, 1), (16, 16, 1), (16, 32, 2), (32, 32, 1), (32, 96, 2),
        (96, 96, 1), (96, 128, 2), (128, 128, 1), (128, 256, 2), (256, hidden_size, 1),
    ]


def init_params(key, in_channels, hidden_size, depth):
    params = {"convs": []}
    for cin, cout, s in conv_specs(in_channels, hidden_size):
        key, k = jax.random.split(key)
        limit = math.sqrt(6.0 / (9 * cin + 9 * cout))
        w = jax.random.uniform(k, (cout, cin, 3, 3), jnp.float32, -limit, limit)
        params["convs"].append((w, jnp.zeros((cout,), jnp.float32), s))
    key, k1, k2 = jax.random.split(key, 3)
    params["t_w1"] = 0.02 * jax.random.normal(k1, (FREQ_DIM, hidden_size), jnp.float32)
    params["t_b1"] = jnp.zeros((hidden_size,), jnp.float32)
    params["t_w2"] = 0.02 * jax.random.normal(k2, (hidden_size, hidden_size), jnp.float32)
    params["t_b2"] = jnp.zeros((hidden_size,), jnp.float32)
    # ZeroControlBlocks (zero_init=False style: std=0.01, zero bias -> non-trivial test)
    key, ka, kl = jax.random.split(key, 3)
    params["za_w"] = 0.01 * jax.random.normal(ka, (depth, hidden_size, 2 * hidden_size), jnp.float32)
    params["za_b"] = jnp.zeros((depth, 1, 2 * hidden_size), jnp.float32)
    params["zl_w"] = 0.01 * jax.random.normal(kl, (depth, hidden_size, hidden_size), jnp.float32)
    params["zl_b"] = jnp.zeros((depth, 1, hidden_size), jnp.float32)
    return params


# ---------------------------------------------------------------------------
# ControlMLP forward (eval mode: no dropout / plucker / noise)
# ---------------------------------------------------------------------------

def control_mlp_forward(params, dense_cond_nchw, t):
    # TODO(synk): training-only paths (control dropout, plucker/SIREN, noise_std)
    # are not implemented in this eval-mode forward.
    freq = timestep_embedding(t)
    s = t_embed_silu(freq, params["t_w1"], params["t_b1"], params["t_w2"], params["t_b2"])
    h = jnp.transpose(dense_cond_nchw, (0, 2, 3, 1))         # NCHW -> NHWC
    n_conv = len(params["convs"])
    for i, (w, b, stride) in enumerate(params["convs"]):
        act = "silu" if i < n_conv - 1 else "none"
        h = conv3x3(h, w, b, stride, act)
    B, Ho, Wo, C = h.shape
    h = h.reshape(B, Ho * Wo, C)                             # 'B C H W -> B (H W) C'
    out = zero_blocks(h, s, params["za_w"], params["za_b"], params["zl_w"], params["zl_b"])
    return [out[d] for d in range(out.shape[0])]


# ---------------------------------------------------------------------------
# Pure-JAX f32 reference for validation
# ---------------------------------------------------------------------------

def reference_forward(params, dense_cond_nchw, t):
    temb = timestep_embedding(t)
    temb = jax.nn.silu(temb @ params["t_w1"] + params["t_b1"])
    temb = temb @ params["t_w2"] + params["t_b2"]
    s = jax.nn.silu(temb)
    h = dense_cond_nchw
    n_conv = len(params["convs"])
    for i, (w, b, stride) in enumerate(params["convs"]):
        h = jax.lax.conv_general_dilated(
            h, w, (stride, stride), [(1, 1), (1, 1)],
            dimension_numbers=("NCHW", "OIHW", "NCHW"),
        ) + b[None, :, None, None]
        if i < n_conv - 1:
            h = jax.nn.silu(h)
    B, C, H, W = h.shape
    h = jnp.transpose(h, (0, 2, 3, 1)).reshape(B, H * W, C)
    controls = []
    for d in range(params["za_w"].shape[0]):
        ada = s @ params["za_w"][d] + params["za_b"][d, 0]
        shift, scale = ada[:, :C], ada[:, C:]
        hm = h * (1.0 + scale[:, None, :]) + shift[:, None, :]
        controls.append(jnp.einsum("bnc,cd->bnd", hm, params["zl_w"][d]) + params["zl_b"][d, 0])
    return controls


# ---------------------------------------------------------------------------

if __name__ == "__main__":
    B, IN_CH, H, W = 2, 4, 16, 16
    HIDDEN, DEPTH = 32, 2

    root = jax.random.PRNGKey(0)
    k_param, k_x, k_t = jax.random.split(root, 3)
    params = init_params(k_param, IN_CH, HIDDEN, DEPTH)

    dense_cond = jax.random.normal(k_x, (B, IN_CH, H, W), jnp.float32)
    t = jax.random.uniform(k_t, (B,), jnp.float32, 0.0, 1000.0)

    controls = control_mlp_forward(params, dense_cond, t)
    controls = [jax.block_until_ready(c) for c in controls]

    refs = reference_forward(params, dense_cond, t)
    refs = [jax.block_until_ready(r) for r in refs]

    ok = True
    for c, r in zip(controls, refs):
        c, r = np.asarray(c, dtype=np.float32), np.asarray(r, dtype=np.float32)
        denom = np.max(np.abs(r)) + 1e-6
        if np.max(np.abs(c - r)) / denom > 5e-2:
            ok = False

    if ok:
        print("KERNEL_OK")
    else:
        print("KERNEL_MISMATCH")
</pallas_src>

<mosaic_0001>
module attributes {stable_mosaic.version = 11 : i64} {
  func.func @_temb_kernel(%arg0: memref<2x256xbf16, #tpu.memory_space<vmem>>, %arg1: memref<256x32xbf16, #tpu.memory_space<vmem>>, %arg2: memref<1x32xf32, #tpu.memory_space<vmem>>, %arg3: memref<32x32xbf16, #tpu.memory_space<vmem>>, %arg4: memref<1x32xf32, #tpu.memory_space<vmem>>, %arg5: memref<2x32xbf16, #tpu.memory_space<vmem>>) attributes {dimension_semantics = [], scalar_prefetch = 0 : i64, scratch_operands = 0 : i64, tpu.core_type = #tpu.core_type<tc>} {
    %c0 = arith.constant 0 : index
    %c0_0 = arith.constant 0 : index
    %0 = vector.load %arg0[%c0, %c0_0] : memref<2x256xbf16, #tpu.memory_space<vmem>>, vector<2x256xbf16>
    %c0_1 = arith.constant 0 : index
    %c0_2 = arith.constant 0 : index
    %1 = vector.load %arg1[%c0_1, %c0_2] : memref<256x32xbf16, #tpu.memory_space<vmem>>, vector<256x32xbf16>
    %cst = arith.constant dense<0.000000e+00> : vector<2x32xf32>
    %2 = tpu.matmul %0, %1, %cst {dimension_numbers = #tpu.dot_dimension_numbers<[1], [0], [0], [1], [0, 0, 1, 1], [], []>} : vector<2x256xbf16>, vector<256x32xbf16>, vector<2x32xf32> -> vector<2x32xf32>
    %c0_3 = arith.constant 0 : index
    %c0_4 = arith.constant 0 : index
    %3 = vector.load %arg2[%c0_3, %c0_4] : memref<1x32xf32, #tpu.memory_space<vmem>>, vector<1x32xf32>
    %4 = vector.broadcast %3 : vector<1x32xf32> to vector<2x32xf32>
    %5 = arith.addf %2, %4 : vector<2x32xf32>
    %6 = arith.negf %5 : vector<2x32xf32>
    %7 = math.exp %6 : vector<2x32xf32>
    %cst_5 = arith.constant 1.000000e+00 : f32
    %8 = vector.broadcast %cst_5 : f32 to vector<2x32xf32>
    %9 = arith.addf %8, %7 : vector<2x32xf32>
    %10 = arith.divf %8, %9 : vector<2x32xf32>
    %11 = arith.mulf %5, %10 : vector<2x32xf32>
    %12 = arith.truncf %11 : vector<2x32xf32> to vector<2x32xbf16>
    %c0_6 = arith.constant 0 : index
    %c0_7 = arith.constant 0 : index
    %13 = vector.load %arg3[%c0_6, %c0_7] : memref<32x32xbf16, #tpu.memory_space<vmem>>, vector<32x32xbf16>
    %cst_8 = arith.constant dense<0.000000e+00> : vector<2x32xf32>
    %14 = tpu.matmul %12, %13, %cst_8 {dimension_numbers = #tpu.dot_dimension_numbers<[1], [0], [0], [1], [0, 0, 1, 1], [], []>} : vector<2x32xbf16>, vector<32x32xbf16>, vector<2x32xf32> -> vector<2x32xf32>
    %c0_9 = arith.constant 0 : index
    %c0_10 = arith.constant 0 : index
    %15 = vector.load %arg4[%c0_9, %c0_10] : memref<1x32xf32, #tpu.memory_space<vmem>>, vector<1x32xf32>
    %16 = vector.broadcast %15 : vector<1x32xf32> to vector<2x32xf32>
    %17 = arith.addf %14, %16 : vector<2x32xf32>
    %18 = arith.negf %17 : vector<2x32xf32>
    %19 = math.exp %18 : vector<2x32xf32>
    %cst_11 = arith.constant 1.000000e+00 : f32
    %20 = vector.broadcast %cst_11 : f32 to vector<2x32xf32>
    %21 = arith.addf %20, %19 : vector<2x32xf32>
    %22 = arith.divf %20, %21 : vector<2x32xf32>
    %23 = arith.mulf %17, %22 : vector<2x32xf32>
    %24 = arith.truncf %23 : vector<2x32xf32> to vector<2x32xbf16>
    %c0_12 = arith.constant 0 : index
    %c0_13 = arith.constant 0 : index
    %25 = vector.load %arg5[%c0_12, %c0_13] : memref<2x32xbf16, #tpu.memory_space<vmem>>, vector<2x32xbf16>
    tpu.vector_store %arg5[%c0_12, %c0_13], %24 {strides = array<i32>} : memref<2x32xbf16, #tpu.memory_space<vmem>>, vector<2x32xbf16>,
    return
  }
}

</mosaic_0001>

<llo_original>
// kernel: tpu_custom_call.1
$region0: #{tpu_custom_call.1}
  #allocation0 [shape = 'u32[]', space=smem, size = 0x4, offset = 0x4, fixed_abs, tag = 'smem constant byte address 0x4 - core index']
  #allocation1 [shape = 'u32[144,128]{1,0:T(1,128)}', space=vmem, size = 0x12000, scoped, tag = 'internal scratch']
  %s0 = inlined_call_operand.vmem [shape: bf16[2,256], index: 0, kind: input, shape index: {}]
  %s1 = inlined_call_operand.vmem [shape: bf16[256,32], index: 1, kind: input, shape index: {}]
  %s2 = inlined_call_operand.vmem [shape: f32[1,32], index: 2, kind: input, shape index: {}]
  %s3 = inlined_call_operand.vmem [shape: bf16[32,32], index: 3, kind: input, shape index: {}]
  %s4 = inlined_call_operand.vmem [shape: f32[1,32], index: 4, kind: input, shape index: {}]
  %s5 = inlined_call_operand.hbm [shape: bf16[2,32], index: 5, kind: output, shape index: {}]
  %s6 = sld [smem:[#allocation0]]
  $region30: #{tpu_custom_call.1} parent=0
    _
  %s8 = ssub.s32 1, %s6
  %s9 = scalar_select 0, %s8, %s6
  $region1: #{tpu_custom_call.1} parent=0
    #allocation2 [shape = 'u8[512]{0}', space=vmem, size = 0x400, scoped, tag = 'output window, operand 0, single buffered']
    #allocation3 [shape = 's32[1]{0}', space=sflag, size = 0x4, scoped, tag = 'scoped memory for tpu_custom_call.1']
    %10 = vsyncpa [#allocation3], 0
    // Predicated region
    $region2: #{tpu_custom_call.1} parent=1 // pred_check
      _
    $region3: #{tpu_custom_call.1} parent=1 // pred_check_branch
      %12 = sbr.rel (0) target = $region5
    $region4: #{tpu_custom_call.1} parent=1 // pred_region
      _
    $region5: #{tpu_custom_call.1} parent=1 // pred_fallthru
      _
    // Predicated region
    $region6: #{tpu_custom_call.1} parent=1 // pred_check
      _
    $region7: #{tpu_custom_call.1} parent=1 // pred_check_branch
      %14 = sbr.rel (0) target = $region9
    $region8: #{tpu_custom_call.1} parent=1 // pred_region
      _
    $region9: #{tpu_custom_call.1} parent=1 // pred_fallthru
      _
    // Predicated region
    $region10: #{tpu_custom_call.1} parent=1 // pred_check
      _
    $region11: #{tpu_custom_call.1} parent=1 // pred_check_branch
      %16 = sbr.rel (0) target = $region13
    $region12: #{tpu_custom_call.1} parent=1 // pred_region
      _
    $region13: #{tpu_custom_call.1} parent=1 // pred_fallthru
      _
    // Predicated region
    $region14: #{tpu_custom_call.1} parent=1 // pred_check
      _
    $region15: #{tpu_custom_call.1} parent=1 // pred_check_branch
      %18 = sbr.rel (0) target = $region17
    $region16: #{tpu_custom_call.1} parent=1 // pred_region
      _
    $region17: #{tpu_custom_call.1} parent=1 // pred_fallthru
      _
    // Predicated region
    $region18: #{tpu_custom_call.1} parent=1 // pred_check
      _
    $region19: #{tpu_custom_call.1} parent=1 // pred_check_branch
      %20 = sbr.rel (0) target = $region21
    $region20: #{tpu_custom_call.1} parent=1 // pred_region
      _
    $region21: #{tpu_custom_call.1} parent=1 // pred_fallthru
      _
    %v22 = vld [vmem:[%s0] sm:$0x3]
    %v23 = vld [vmem:[%s1] sm:$0xf]
    %v24 = vld [vmem:[%s1 + $0x4] sm:$0xf]
    %v25 = vld [vmem:[%s1 + $0x8] sm:$0xf]
    %v26 = vld [vmem:[%s1 + $0xc] sm:$0xf]
    %v27 = vld [vmem:[%s1 + $0x10] sm:$0xf]
    %v28 = vld [vmem:[%s1 + $0x14] sm:$0xf]
    %v29 = vld [vmem:[%s1 + $0x18] sm:$0xf]
    %v30 = vld [vmem:[%s1 + $0x1c] sm:$0xf]
    %v31 = vld [vmem:[%s1 + $0x20] sm:$0xf]
    %v32 = vld [vmem:[%s1 + $0x24] sm:$0xf]
    %v33 = vld [vmem:[%s1 + $0x28] sm:$0xf]
    %v34 = vld [vmem:[%s1 + $0x2c] sm:$0xf]
    %v35 = vld [vmem:[%s1 + $0x30] sm:$0xf]
    %v36 = vld [vmem:[%s1 + $0x34] sm:$0xf]
    %v37 = vld [vmem:[%s1 + $0x38] sm:$0xf]
    %v38 = vld [vmem:[%s1 + $0x3c] sm:$0xf]
    %v39 = vld [vmem:[%s1 + $0x40] sm:$0xf]
    %v40 = vld [vmem:[%s1 + $0x44] sm:$0xf]
    %v41 = vld [vmem:[%s1 + $0x48] sm:$0xf]
    %v42 = vld [vmem:[%s1 + $0x4c] sm:$0xf]
    %v43 = vld [vmem:[%s1 + $0x50] sm:$0xf]
    %v44 = vld [vmem:[%s1 + $0x54] sm:$0xf]
    %v45 = vld [vmem:[%s1 + $0x58] sm:$0xf]
    %v46 = vld [vmem:[%s1 + $0x5c] sm:$0xf]
    %v47 = vld [vmem:[%s1 + $0x60] sm:$0xf]
    %v48 = vld [vmem:[%s1 + $0x64] sm:$0xf]
    %v49 = vld [vmem:[%s1 + $0x68] sm:$0xf]
    %v50 = vld [vmem:[%s1 + $0x6c] sm:$0xf]
    %v51 = vld [vmem:[%s1 + $0x70] sm:$0xf]
    %v52 = vld [vmem:[%s1 + $0x74] sm:$0xf]
    %v53 = vld [vmem:[%s1 + $0x78] sm:$0xf]
    %v54 = vld [vmem:[%s1 + $0x7c] sm:$0xf]
    %v55 = vld [vmem:[%s2] sm:$0x1]
    %v57 = vlaneseq
    %v58 = vshrl.u32 %v57, 7
    %v59 = vsub.s32 0, %v58
    %v60 = vrot.slane %v55, %v59
    %v64 = vunpack.c.l.s4 1966171168
    %v65 = vunpack.c.0.s8 %v64
    %v66 = vlaneseq
    %v67 = vshrl.u32 %v66, 7
    %v68 = vsub.s32 %v65, %v67
    %v69 = vrot.slane %v22, %v68
    %v70 = vcombine.high %v69, %v69
    %v72 = vunpack.c.l.s4 1966171168
    %v73 = vunpack.c.0.s8 %v72
    %v74 = vlaneseq
    %v75 = vshrl.u32 %v74, 7
    %v76 = vsub.s32 %v73, %v75
    %v77 = vrot.slane %v69, %v76
    %v79 = vunpack.c.l.s4 1966171168
    %v80 = vunpack.c.0.s8 %v79
    %v81 = vlaneseq
    %v82 = vshrl.u32 %v81, 7
    %v83 = vsub.s32 %v80, %v82
    %v84 = vrot.slane %v70, %v83
    %v119 = vunpack.c.l.b16 %v23
    %v120 = vunpack.c.l.b16 %v24
    %v121 = vunpack.c.l.b16 %v25
    %v122 = vunpack.c.l.b16 %v26
    %v123 = vunpack.c.l.b16 %v27
    %v124 = vunpack.c.l.b16 %v28
    %v125 = vunpack.c.l.b16 %v29
    %v126 = vunpack.c.l.b16 %v30
    %v127 = vunpack.c.l.b16 %v31
    %v128 = vunpack.c.l.b16 %v32
    %v129 = vunpack.c.l.b16 %v33
    %v130 = vunpack.c.l.b16 %v34
    %v131 = vunpack.c.l.b16 %v35
    %v132 = vunpack.c.l.b16 %v36
    %v133 = vunpack.c.l.b16 %v37
    %v134 = vunpack.c.l.b16 %v38
    %v135 = vunpack.c.l.b16 %v39
    %v136 = vunpack.c.l.b16 %v40
    %v137 = vunpack.c.l.b16 %v41
    %v138 = vunpack.c.l.b16 %v42
    %v139 = vunpack.c.l.b16 %v43
    %v140 = vunpack.c.l.b16 %v44
    %v141 = vunpack.c.l.b16 %v45
    %v142 = vunpack.c.l.b16 %v46
    %v143 = vunpack.c.l.b16 %v47
    %v144 = vunpack.c.l.b16 %v48
    %v145 = vunpack.c.l.b16 %v49
    %v146 = vunpack.c.l.b16 %v50
    %v147 = vunpack.c.l.b16 %v51
    %v148 = vunpack.c.l.b16 %v52
    %v149 = vunpack.c.l.b16 %v53
    %v150 = vunpack.c.l.b16 %v54
    %v151 = vpack.c.b16 %v120, %v119
    %v152 = vpack.c.b16 %v122, %v121
    %v153 = vpack.c.b16 %v124, %v123
    %v154 = vpack.c.b16 %v126, %v125
    %v155 = vpack.c.b16 %v128, %v127
    %v156 = vpack.c.b16 %v130, %v129
    %v157 = vpack.c.b16 %v132, %v131
    %v158 = vpack.c.b16 %v134, %v133
    %v159 = vpack.c.b16 %v136, %v135
    %v160 = vpack.c.b16 %v138, %v137
    %v161 = vpack.c.b16 %v140, %v139
    %v162 = vpack.c.b16 %v142, %v141
    %v163 = vpack.c.b16 %v144, %v143
    %v164 = vpack.c.b16 %v146, %v145
    %v165 = vpack.c.b16 %v148, %v147
    %v166 = vpack.c.b16 %v150, %v149
    %183 = vmatprep.subr.bf16.mxu0 0
    %184 = vmatpush1.bf16.msra.mxu0 %v151
    %185 = vmatprep.subr.bf16.mxu0 0
    %186 = vmatpush1.bf16.msra.mxu0 %v152
    %187 = vmatprep.subr.bf16.mxu0 0
    %188 = vmatpush1.bf16.msra.mxu0 %v153
    %189 = vmatprep.subr.bf16.mxu0 0
    %190 = vmatpush1.bf16.msra.mxu0 %v154
    %191 = vmatprep.subr.bf16.mxu0 0
    %192 = vmatpush1.bf16.msra.mxu0 %v155
    %193 = vmatprep.subr.bf16.mxu0 0
    %194 = vmatpush1.bf16.msra.mxu0 %v156
    %195 = vmatprep.subr.bf16.mxu0 0
    %196 = vmatpush1.bf16.msra.mxu0 %v157
    %197 = vmatprep.subr.bf16.mxu0 0
    %198 = vmatpush1.bf16.msra.mxu0 %v158
    %199 = vmatprep.subr.bf16.mxu0 0
    %200 = vmatpush1.bf16.msra.mxu0 %v159
    %201 = vmatprep.subr.bf16.mxu0 0
    %202 = vmatpush1.bf16.msra.mxu0 %v160
    %203 = vmatprep.subr.bf16.mxu0 0
    %204 = vmatpush1.bf16.msra.mxu0 %v161
    %205 = vmatprep.subr.bf16.mxu0 0
    %206 = vmatpush1.bf16.msra.mxu0 %v162
    %207 = vmatprep.subr.bf16.mxu0 0
    %208 = vmatpush1.bf16.msra.mxu0 %v163
    %209 = vmatprep.subr.bf16.mxu0 0
    %210 = vmatpush1.bf16.msra.mxu0 %v164
    %211 = vmatprep.subr.bf16.mxu0 0
    %212 = vmatpush1.bf16.msra.mxu0 %v165
    %213 = vmatprep.subr.bf16.mxu0 0
    %214 = vmatpush1.bf16.msra.mxu0 %v166
    %215 = vmatprep.mubr.bf16.mxu0 %v84
    %216 = vmatmul.mubr.bf16.gmra.mrb[0].mxu0 %v77
    %v217 = vpop.f32.mrb[0].mxu0
    %v218 = vadd.f32 %v60, %v217
    %v219 = vpop.f32.mrb[0].mxu0
    %v220 = vpop.f32.mrb[0].mxu0
    %v221 = vpop.f32.mrb[0].mxu0
    %222 = vdwg.mxu0
    %v223 = vxor.u32 %v218, 2147483648
    %v224 = vmul.f32 %v223, 1.442695
    %v225 = vpow.pop %v224
    %v226 = vadd.f32 %v225, 1.0
    %v227 = vrcp.pop %v226
    %v228 = vmul.f32 1.0, %v227
    %v229 = vmul.f32 %v218, %v228
    %v230 = vpack.c.bf16 %v229, %v229
    %v231 = vld [vmem:[%s3] sm:$0xf]
    %v232 = vld [vmem:[%s3 + $0x4] sm:$0xf]
    %v233 = vld [vmem:[%s3 + $0x8] sm:$0xf]
    %v234 = vld [vmem:[%s3 + $0xc] sm:$0xf]
    %v235 = vld [vmem:[%s4] sm:$0x1]
    %v237 = vlaneseq
    %v238 = vshrl.u32 %v237, 7
    %v239 = vsub.s32 0, %v238
    %v240 = vrot.slane %v235, %v239
    %v246 = vunpack.c.l.b16 %v231
    %v247 = vunpack.c.l.b16 %v232
    %v248 = vunpack.c.l.b16 %v233
    %v249 = vunpack.c.l.b16 %v234
    %v250 = vpack.c.b16 %v247, %v246
    %v251 = vpack.c.b16 %v249, %v248
    %vm254 = vcmask 261120
    %v256 = vsel %vm254, %v230, 0
    %258 = vmatprep.subr.bf16.mxu0 0
    %259 = vmatpush1.bf16.msra.mxu0 %v250
    %260 = vmatprep.subr.bf16.mxu0 0
    %261 = vmatpush1.bf16.msra.mxu0 %v251
    %262 = vmatprep.subr.bf16.mxu0 0
    %263 = vmatpush1.bf16.msra.mxu0 0
    %264 = vmatprep.subr.bf16.mxu0 0
    %265 = vmatpush1.bf16.msra.mxu0 0
    %266 = vmatprep.subr.bf16.mxu0 0
    %267 = vmatpush1.bf16.msra.mxu0 0
    %268 = vmatprep.subr.bf16.mxu0 0
    %269 = vmatpush1.bf16.msra.mxu0 0
    %270 = vmatprep.subr.bf16.mxu0 0
    %271 = vmatpush1.bf16.msra.mxu0 0
    %272 = vmatprep.subr.bf16.mxu0 0
    %273 = vmatpush1.bf16.msra.mxu0 0
    %274 = vmatprep.subr.bf16.mxu0 0
    %275 = vmatpush1.bf16.msra.mxu0 0
    %276 = vmatprep.subr.bf16.mxu0 0
    %277 = vmatpush1.bf16.msra.mxu0 0
    %278 = vmatprep.subr.bf16.mxu0 0
    %279 = vmatpush1.bf16.msra.mxu0 0
    %280 = vmatprep.subr.bf16.mxu0 0
    %281 = vmatpush1.bf16.msra.mxu0 0
    %282 = vmatprep.subr.bf16.mxu0 0
    %283 = vmatpush1.bf16.msra.mxu0 0
    %284 = vmatprep.subr.bf16.mxu0 0
    %285 = vmatpush1.bf16.msra.mxu0 0
    %286 = vmatprep.subr.bf16.mxu0 0
    %287 = vmatpush1.bf16.msra.mxu0 0
    %288 = vmatprep.subr.bf16.mxu0 0
    %289 = vmatpush1.bf16.msra.mxu0 0
    %290 = vmatprep.mubr.bf16.mxu0 0
    %291 = vmatmul.mubr.bf16.gmra.mrb[0].mxu0 %v256
    %v292 = vpop.f32.mrb[0].mxu0
    %v293 = vadd.f32 %v240, %v292
    %v294 = vpop.f32.mrb[0].mxu0
    %v295 = vpop.f32.mrb[0].mxu0
    %v296 = vpop.f32.mrb[0].mxu0
    %297 = vdwg.mxu0
    %v298 = vxor.u32 %v293, 2147483648
    %v299 = vmul.f32 %v298, 1.442695
    %v300 = vpow.pop %v299
    %v301 = vadd.f32 %v300, 1.0
    %v302 = vrcp.pop %v301
    %v303 = vmul.f32 1.0, %v302
    %v304 = vmul.f32 %v293, %v303
    %v305 = vpack.c.bf16 %v304, %v304
    %vm306 = vcmask 253952
    %307 = vst.msk [vmem:[#allocation2] sm:$0x1] %vm306, %v305
    // Predicated region
    $region22: #{tpu_custom_call.1} parent=1 // pred_check
      _
    $region23: #{tpu_custom_call.1} parent=1 // pred_check_branch
      %309 = sbr.rel (0) target = $region25
    $region24: #{tpu_custom_call.1} parent=1 // pred_region
      %s311 = ssub.s32 16, 16
      %312 = vsyncadd [#allocation3], %s311
      %s314 = sshll.u32 [#allocation2], 4
      %s315 = int_to_ptr.vmem [resolvable:$true] %s314
      %317 = dma.vmem_to_hbm [thread:$0]  %s315, 16, %s5, [#allocation3]
    $region25: #{tpu_custom_call.1} parent=1 // pred_fallthru
      _
    // Predicated region
    $region26: #{tpu_custom_call.1} parent=1 // pred_check
      _
    $region27: #{tpu_custom_call.1} parent=1 // pred_check_branch
      %319 = sbr.rel (0) target = $region29
    $region28: #{tpu_custom_call.1} parent=1 // pred_region
      %320 = dma.done [#allocation3], 16
    $region29: #{tpu_custom_call.1} parent=1 // pred_fallthru
      _
    %321 = vsyncpa [#allocation3], 1

</llo_original>
